<compile_context>
chip_gen: v6e
topology: v6e:2x2x1
jax: 0.10.0
libtpu: 0.0.40
codegen_flags: <defaults>
</compile_context>

<pallas_src>
import functools
import math

import jax
import jax.numpy as jnp
from jax.experimental import pallas as pl
from jax.experimental.pallas import tpu as pltpu


def _layernorm(t, eps=1e-5):
    # PyTorch LayerNorm: biased variance, eps inside the rsqrt, identity affine.
    mu = jnp.mean(t, axis=-1, keepdims=True)
    var = jnp.mean((t - mu) * (t - mu), axis=-1, keepdims=True)
    return (t - mu) * jax.lax.rsqrt(var + eps)


def head_kernel(x_ref, wqkv_ref, o_ref):
    # x_ref: [S, HD] bf16 (one sample), wqkv_ref: [HD, 3D] bf16, o_ref: [S, D] f32.
    D = o_ref.shape[-1]

    # Fused QKV projection: one MXU matmul (bf16 operands, f32 accumulation).
    qkv = jnp.dot(x_ref[...], wqkv_ref[...], preferred_element_type=jnp.float32)

    q = _layernorm(qkv[:, :D])
    k = _layernorm(qkv[:, D:2 * D])
    v = _layernorm(qkv[:, 2 * D:])

    scale = 1.0 / math.sqrt(float(D))  # Q.shape[1] == weight_dimension for 2-D x

    # Scores: contract feature dims directly — no explicit k.T / XLU transpose.
    s = jax.lax.dot_general(
        q.astype(jnp.bfloat16), k.astype(jnp.bfloat16),
        dimension_numbers=(((1,), (1,)), ((), ())),
        preferred_element_type=jnp.float32,
    ) * scale

    # Numerically-stable softmax; denominator reciprocal on the EUP (approx).
    s = s - jnp.max(s, axis=-1, keepdims=True)
    p = jnp.exp(s)
    p = p * pl.reciprocal(jnp.sum(p, axis=-1, keepdims=True), approx=True)

    out = jnp.dot(p.astype(jnp.bfloat16), v.astype(jnp.bfloat16),
                  preferred_element_type=jnp.float32)
    o_ref[...] = out.astype(o_ref.dtype)


@jax.jit
def head_forward(x, w1, w2, w3):
    """Head forward. x: [S, HD] (module semantics) or [B, S, HD] (batched)."""
    squeeze = x.ndim == 2
    if squeeze:
        x = x[None]
    B, S, HD = x.shape
    D = w1.shape[1]

    # Fuse the three projection weights once, in the wrapper: [HD, 3D].
    wqkv = jnp.concatenate([w1, w2, w3], axis=1).astype(jnp.bfloat16)
    xb = x.astype(jnp.bfloat16)  # halves HBM->VMEM traffic of the activations

    out = pl.pallas_call(
        head_kernel,
        out_shape=jax.ShapeDtypeStruct((B, S, D), jnp.float32),
        grid=(B,),
        in_specs=[
            pl.BlockSpec((None, S, HD), lambda b: (b, 0, 0)),  # per-sample block
            pl.BlockSpec((HD, 3 * D), lambda b: (0, 0)),       # resident weights
        ],
        out_specs=pl.BlockSpec((None, S, D), lambda b: (b, 0, 0)),
        compiler_params=pltpu.CompilerParams(
            dimension_semantics=("parallel",),  # independent samples -> both v7x TCs
        ),
    )(xb, wqkv)
    return out[0] if squeeze else out


def head_reference_f32(x, w1, w2, w3):
    """Pure-f32 JAX reference (the PyTorch module spec)."""
    q = _layernorm(x @ w1)
    k = _layernorm(x @ w2)
    v = _layernorm(x @ w3)
    s = (q @ k.T) / jnp.sqrt(jnp.float32(q.shape[-1]))
    return jax.nn.softmax(s, axis=-1) @ v


def head_reference_matched(x, w1, w2, w3):
    """JAX reference with the same bf16-operand / f32-accumulate numerics as the
    kernel (exact softmax division) — isolates kernel bugs from dtype effects."""
    D = w1.shape[1]
    wqkv = jnp.concatenate([w1, w2, w3], axis=1).astype(jnp.bfloat16)
    qkv = jnp.dot(x.astype(jnp.bfloat16), wqkv, preferred_element_type=jnp.float32)
    q = _layernorm(qkv[:, :D])
    k = _layernorm(qkv[:, D:2 * D])
    v = _layernorm(qkv[:, 2 * D:])
    s = jnp.dot(q.astype(jnp.bfloat16), k.astype(jnp.bfloat16).T,
                preferred_element_type=jnp.float32) / math.sqrt(float(D))
    p = jax.nn.softmax(s, axis=-1)
    return jnp.dot(p.astype(jnp.bfloat16), v.astype(jnp.bfloat16),
                   preferred_element_type=jnp.float32)


if __name__ == "__main__":
    num_heads = 4
    weight_dimension = 32
    seq = 8
    hidden = num_heads * weight_dimension  # 128

    key = jax.random.PRNGKey(0)
    kx, k1, k2, k3 = jax.random.split(key, 4)

    # Deterministic synthetic inputs / parameters (module uses torch.randn).
    x = jax.random.normal(kx, (seq, hidden), dtype=jnp.float32)
    w1 = jax.random.normal(k1, (hidden, weight_dimension), dtype=jnp.float32)
    w2 = jax.random.normal(k2, (hidden, weight_dimension), dtype=jnp.float32)
    w3 = jax.random.normal(k3, (hidden, weight_dimension), dtype=jnp.float32)

    # --- single-sample forward (exact module semantics, 2-D x) ---
    out = jax.block_until_ready(head_forward(x, w1, w2, w3))
    assert out.shape == (seq, weight_dimension)

    ref_matched = jax.block_until_ready(head_reference_matched(x, w1, w2, w3))
    ref_f32 = jax.block_until_ready(head_reference_f32(x, w1, w2, w3))

    # Tight check vs matched-precision reference (catches structural bugs).
    assert jnp.allclose(out, ref_matched, atol=2e-2, rtol=2e-2), \
        "mismatch vs matched-precision reference"
    # Looser check vs the pure-f32 spec reference (bf16 MXU operands + approx
    # reciprocal introduce small, benign deviations).
    assert jnp.allclose(out, ref_f32, atol=1e-1, rtol=1e-1), \
        "mismatch vs f32 reference"

    # --- batched forward: B independent samples, one pallas_call, parallel grid ---
    xb = jax.random.normal(jax.random.PRNGKey(1), (4, seq, hidden), dtype=jnp.float32)
    outb = jax.block_until_ready(head_forward(xb, w1, w2, w3))
    refb = jax.block_until_ready(
        jax.vmap(lambda xi: head_reference_matched(xi, w1, w2, w3))(xb))
    assert outb.shape == (4, seq, weight_dimension)
    assert jnp.allclose(outb, refb, atol=2e-2, rtol=2e-2), "batched mismatch"

    print("KERNEL_OK")
</pallas_src>

<mosaic_0001>
module attributes {stable_mosaic.version = 11 : i64} {
  func.func @head_kernel(%arg0: i32, %arg1: memref<1x8x128xbf16, #tpu.memory_space<vmem>>, %arg2: memref<128x96xbf16, #tpu.memory_space<vmem>>, %arg3: memref<1x8x32xf32, #tpu.memory_space<vmem>>) attributes {dimension_semantics = [#tpu.dimension_semantics<parallel>], iteration_bounds = array<i64: 1>, scalar_prefetch = 0 : i64, scratch_operands = 0 : i64, tpu.core_type = #tpu.core_type<tc>, window_params = [{transform_indices = @transform_0, window_bounds = array<i64: 1, 8, 128>}, {pipeline_mode = #tpu.pipeline_mode<synchronous>, transform_indices = @transform_1, window_bounds = array<i64: 128, 96>}, {transform_indices = @transform_2, window_bounds = array<i64: 1, 8, 32>}]} {
    %c0 = arith.constant 0 : index
    %c0_0 = arith.constant 0 : index
    %c0_1 = arith.constant 0 : index
    %0 = vector.load %arg1[%c0, %c0_0, %c0_1] : memref<1x8x128xbf16, #tpu.memory_space<vmem>>, vector<1x8x128xbf16>
    %1 = vector.shape_cast %0 : vector<1x8x128xbf16> to vector<8x128xbf16>
    %c0_2 = arith.constant 0 : index
    %c0_3 = arith.constant 0 : index
    %2 = vector.load %arg2[%c0_2, %c0_3] : memref<128x96xbf16, #tpu.memory_space<vmem>>, vector<128x96xbf16>
    %cst = arith.constant dense<0.000000e+00> : vector<8x96xf32>
    %3 = tpu.matmul %1, %2, %cst {dimension_numbers = #tpu.dot_dimension_numbers<[1], [0], [0], [1], [0, 0, 1, 1], [], []>} : vector<8x128xbf16>, vector<128x96xbf16>, vector<8x96xf32> -> vector<8x96xf32>
    %4 = vector.extract_strided_slice %3 {offsets = [0, 0], sizes = [8, 32], strides = [1, 1]} : vector<8x96xf32> to vector<8x32xf32>
    %cst_4 = arith.constant dense<0.000000e+00> : vector<8xf32>
    %5 = vector.multi_reduction <add>, %4, %cst_4 [1] : vector<8x32xf32> to vector<8xf32>
    %6 = vector.shape_cast %5 : vector<8xf32> to vector<8x1xf32>
    %cst_5 = arith.constant 3.200000e+01 : f32
    %7 = vector.broadcast %cst_5 : f32 to vector<8x1xf32>
    %8 = arith.divf %6, %7 : vector<8x1xf32>
    %9 = vector.broadcast %8 : vector<8x1xf32> to vector<8x32xf32>
    %10 = arith.subf %4, %9 : vector<8x32xf32>
    %11 = vector.broadcast %8 : vector<8x1xf32> to vector<8x32xf32>
    %12 = arith.subf %4, %11 : vector<8x32xf32>
    %13 = arith.mulf %10, %12 : vector<8x32xf32>
    %cst_6 = arith.constant dense<0.000000e+00> : vector<8xf32>
    %14 = vector.multi_reduction <add>, %13, %cst_6 [1] : vector<8x32xf32> to vector<8xf32>
    %15 = vector.shape_cast %14 : vector<8xf32> to vector<8x1xf32>
    %cst_7 = arith.constant 3.200000e+01 : f32
    %16 = vector.broadcast %cst_7 : f32 to vector<8x1xf32>
    %17 = arith.divf %15, %16 : vector<8x1xf32>
    %18 = vector.broadcast %8 : vector<8x1xf32> to vector<8x32xf32>
    %19 = arith.subf %4, %18 : vector<8x32xf32>
    %cst_8 = arith.constant 9.99999974E-6 : f32
    %20 = vector.broadcast %cst_8 : f32 to vector<8x1xf32>
    %21 = arith.addf %17, %20 : vector<8x1xf32>
    %22 = math.rsqrt %21 : vector<8x1xf32>
    %23 = vector.broadcast %22 : vector<8x1xf32> to vector<8x32xf32>
    %24 = arith.mulf %19, %23 : vector<8x32xf32>
    %25 = vector.extract_strided_slice %3 {offsets = [0, 32], sizes = [8, 32], strides = [1, 1]} : vector<8x96xf32> to vector<8x32xf32>
    %cst_9 = arith.constant dense<0.000000e+00> : vector<8xf32>
    %26 = vector.multi_reduction <add>, %25, %cst_9 [1] : vector<8x32xf32> to vector<8xf32>
    %27 = vector.shape_cast %26 : vector<8xf32> to vector<8x1xf32>
    %cst_10 = arith.constant 3.200000e+01 : f32
    %28 = vector.broadcast %cst_10 : f32 to vector<8x1xf32>
    %29 = arith.divf %27, %28 : vector<8x1xf32>
    %30 = vector.broadcast %29 : vector<8x1xf32> to vector<8x32xf32>
    %31 = arith.subf %25, %30 : vector<8x32xf32>
    %32 = vector.broadcast %29 : vector<8x1xf32> to vector<8x32xf32>
    %33 = arith.subf %25, %32 : vector<8x32xf32>
    %34 = arith.mulf %31, %33 : vector<8x32xf32>
    %cst_11 = arith.constant dense<0.000000e+00> : vector<8xf32>
    %35 = vector.multi_reduction <add>, %34, %cst_11 [1] : vector<8x32xf32> to vector<8xf32>
    %36 = vector.shape_cast %35 : vector<8xf32> to vector<8x1xf32>
    %cst_12 = arith.constant 3.200000e+01 : f32
    %37 = vector.broadcast %cst_12 : f32 to vector<8x1xf32>
    %38 = arith.divf %36, %37 : vector<8x1xf32>
    %39 = vector.broadcast %29 : vector<8x1xf32> to vector<8x32xf32>
    %40 = arith.subf %25, %39 : vector<8x32xf32>
    %cst_13 = arith.constant 9.99999974E-6 : f32
    %41 = vector.broadcast %cst_13 : f32 to vector<8x1xf32>
    %42 = arith.addf %38, %41 : vector<8x1xf32>
    %43 = math.rsqrt %42 : vector<8x1xf32>
    %44 = vector.broadcast %43 : vector<8x1xf32> to vector<8x32xf32>
    %45 = arith.mulf %40, %44 : vector<8x32xf32>
    %46 = vector.extract_strided_slice %3 {offsets = [0, 64], sizes = [8, 32], strides = [1, 1]} : vector<8x96xf32> to vector<8x32xf32>
    %cst_14 = arith.constant dense<0.000000e+00> : vector<8xf32>
    %47 = vector.multi_reduction <add>, %46, %cst_14 [1] : vector<8x32xf32> to vector<8xf32>
    %48 = vector.shape_cast %47 : vector<8xf32> to vector<8x1xf32>
    %cst_15 = arith.constant 3.200000e+01 : f32
    %49 = vector.broadcast %cst_15 : f32 to vector<8x1xf32>
    %50 = arith.divf %48, %49 : vector<8x1xf32>
    %51 = vector.broadcast %50 : vector<8x1xf32> to vector<8x32xf32>
    %52 = arith.subf %46, %51 : vector<8x32xf32>
    %53 = vector.broadcast %50 : vector<8x1xf32> to vector<8x32xf32>
    %54 = arith.subf %46, %53 : vector<8x32xf32>
    %55 = arith.mulf %52, %54 : vector<8x32xf32>
    %cst_16 = arith.constant dense<0.000000e+00> : vector<8xf32>
    %56 = vector.multi_reduction <add>, %55, %cst_16 [1] : vector<8x32xf32> to vector<8xf32>
    %57 = vector.shape_cast %56 : vector<8xf32> to vector<8x1xf32>
    %cst_17 = arith.constant 3.200000e+01 : f32
    %58 = vector.broadcast %cst_17 : f32 to vector<8x1xf32>
    %59 = arith.divf %57, %58 : vector<8x1xf32>
    %60 = vector.broadcast %50 : vector<8x1xf32> to vector<8x32xf32>
    %61 = arith.subf %46, %60 : vector<8x32xf32>
    %cst_18 = arith.constant 9.99999974E-6 : f32
    %62 = vector.broadcast %cst_18 : f32 to vector<8x1xf32>
    %63 = arith.addf %59, %62 : vector<8x1xf32>
    %64 = math.rsqrt %63 : vector<8x1xf32>
    %65 = vector.broadcast %64 : vector<8x1xf32> to vector<8x32xf32>
    %66 = arith.mulf %61, %65 : vector<8x32xf32>
    %67 = arith.truncf %24 : vector<8x32xf32> to vector<8x32xbf16>
    %68 = arith.truncf %45 : vector<8x32xf32> to vector<8x32xbf16>
    %cst_19 = arith.constant dense<0.000000e+00> : vector<8x8xf32>
    %69 = tpu.matmul %67, %68, %cst_19 {dimension_numbers = #tpu.dot_dimension_numbers<[1], [1], [0], [0], [0, 0, 1, 0], [], []>} : vector<8x32xbf16>, vector<8x32xbf16>, vector<8x8xf32> -> vector<8x8xf32>
    %cst_20 = arith.constant 0.176776692 : f32
    %70 = vector.broadcast %cst_20 : f32 to vector<8x8xf32>
    %71 = arith.mulf %69, %70 : vector<8x8xf32>
    %cst_21 = arith.constant dense<0xFF800000> : vector<8xf32>
    %72 = vector.multi_reduction <maximumf>, %71, %cst_21 [1] : vector<8x8xf32> to vector<8xf32>
    %73 = vector.shape_cast %72 : vector<8xf32> to vector<8x1xf32>
    %74 = vector.broadcast %73 : vector<8x1xf32> to vector<8x8xf32>
    %75 = arith.subf %71, %74 : vector<8x8xf32>
    %76 = math.exp %75 : vector<8x8xf32>
    %cst_22 = arith.constant dense<0.000000e+00> : vector<8xf32>
    %77 = vector.multi_reduction <add>, %76, %cst_22 [1] : vector<8x8xf32> to vector<8xf32>
    %78 = vector.shape_cast %77 : vector<8xf32> to vector<8x1xf32>
    %79 = tpu.reciprocal %78 {approx = true} : vector<8x1xf32> -> vector<8x1xf32>
    %80 = vector.broadcast %79 : vector<8x1xf32> to vector<8x8xf32>
    %81 = arith.mulf %76, %80 : vector<8x8xf32>
    %82 = arith.truncf %81 : vector<8x8xf32> to vector<8x8xbf16>
    %83 = arith.truncf %66 : vector<8x32xf32> to vector<8x32xbf16>
    %cst_23 = arith.constant dense<0.000000e+00> : vector<8x32xf32>
    %84 = tpu.matmul %82, %83, %cst_23 {dimension_numbers = #tpu.dot_dimension_numbers<[1], [0], [0], [1], [0, 0, 1, 1], [], []>} : vector<8x8xbf16>, vector<8x32xbf16>, vector<8x32xf32> -> vector<8x32xf32>
    %c0_24 = arith.constant 0 : index
    %c0_25 = arith.constant 0 : index
    %c0_26 = arith.constant 0 : index
    %85 = vector.load %arg3[%c0_24, %c0_25, %c0_26] : memref<1x8x32xf32, #tpu.memory_space<vmem>>, vector<1x8x32xf32>
    %86 = vector.shape_cast %85 : vector<1x8x32xf32> to vector<8x32xf32>
    %87 = vector.shape_cast %84 : vector<8x32xf32> to vector<1x8x32xf32>
    tpu.vector_store %arg3[%c0_24, %c0_25, %c0_26], %87 {strides = array<i32>} : memref<1x8x32xf32, #tpu.memory_space<vmem>>, vector<1x8x32xf32>,
    return
  }
  func.func @transform_0(%arg0: i32) -> (i32, i32, i32) {
    %c0_i32 = arith.constant 0 : i32
    %c0_i32_0 = arith.constant 0 : i32
    %c0_i32_1 = arith.constant 0 : i32
    return %arg0, %c0_i32, %c0_i32_0 : i32, i32, i32
  }
  func.func @transform_1(%arg0: i32) -> (i32, i32) {
    %c0_i32 = arith.constant 0 : i32
    %c0_i32_0 = arith.constant 0 : i32
    %c0_i32_1 = arith.constant 0 : i32
    return %c0_i32, %c0_i32_0 : i32, i32
  }
  func.func @transform_2(%arg0: i32) -> (i32, i32, i32) {
    %c0_i32 = arith.constant 0 : i32
    %c0_i32_0 = arith.constant 0 : i32
    %c0_i32_1 = arith.constant 0 : i32
    return %arg0, %c0_i32, %c0_i32_0 : i32, i32, i32
  }
}

</mosaic_0001>

<llo_original>
// kernel: head_forward.1
$region0: #{head_forward.1}
  #allocation0 [shape = 'u32[]', space=smem, size = 0x4, offset = 0x4, fixed_abs, tag = 'smem constant byte address 0x4 - core index']
  #allocation1 [shape = 'u32[144,128]{1,0:T(1,128)}', space=vmem, size = 0x12000, scoped, tag = 'internal scratch']
  %s0 = inlined_call_operand.vmem [shape: bf16[1,8,128], index: 0, kind: input, shape index: {}]
  %s1 = inlined_call_operand.vmem [shape: bf16[128,96], index: 1, kind: input, shape index: {}]
  %s2 = inlined_call_operand.hbm [shape: f32[1,8,32], index: 2, kind: output, shape index: {}]
  %s3 = sld [smem:[#allocation0]]
  $region18: #{head_forward.1} parent=0
    _
  %s5 = ssub.s32 1, %s3
  %s6 = scalar_select 0, %s5, %s3
  $region1: #{head_forward.1} parent=0
    #allocation2 [shape = 'u8[4096]{0}', space=vmem, size = 0x1000, scoped, tag = 'output window, operand 0, single buffered']
    #allocation3 [shape = 's32[1]{0}', space=sflag, size = 0x4, scoped, tag = 'scoped memory for head_forward.1']
    %7 = vsyncpa [#allocation3], 0
    // Predicated region
    $region2: #{head_forward.1} parent=1 // pred_check
      _
    $region3: #{head_forward.1} parent=1 // pred_check_branch
      %9 = sbr.rel (0) target = $region5
    $region4: #{head_forward.1} parent=1 // pred_region
      _
    $region5: #{head_forward.1} parent=1 // pred_fallthru
      _
    // Predicated region
    $region6: #{head_forward.1} parent=1 // pred_check
      _
    $region7: #{head_forward.1} parent=1 // pred_check_branch
      %11 = sbr.rel (0) target = $region9
    $region8: #{head_forward.1} parent=1 // pred_region
      _
    $region9: #{head_forward.1} parent=1 // pred_fallthru
      _
    %v13 = vld [vmem:[%s0] sm:$0xf]
    %v14 = vld [vmem:[%s1] sm:$0xf]
    %v15 = vld [vmem:[%s1 + $0x4] sm:$0xf]
    %v16 = vld [vmem:[%s1 + $0x8] sm:$0xf]
    %v17 = vld [vmem:[%s1 + $0xc] sm:$0xf]
    %v18 = vld [vmem:[%s1 + $0x10] sm:$0xf]
    %v19 = vld [vmem:[%s1 + $0x14] sm:$0xf]
    %v20 = vld [vmem:[%s1 + $0x18] sm:$0xf]
    %v21 = vld [vmem:[%s1 + $0x1c] sm:$0xf]
    %v22 = vld [vmem:[%s1 + $0x20] sm:$0xf]
    %v23 = vld [vmem:[%s1 + $0x24] sm:$0xf]
    %v24 = vld [vmem:[%s1 + $0x28] sm:$0xf]
    %v25 = vld [vmem:[%s1 + $0x2c] sm:$0xf]
    %v26 = vld [vmem:[%s1 + $0x30] sm:$0xf]
    %v27 = vld [vmem:[%s1 + $0x34] sm:$0xf]
    %v28 = vld [vmem:[%s1 + $0x38] sm:$0xf]
    %v29 = vld [vmem:[%s1 + $0x3c] sm:$0xf]
    %v46 = vunpack.c.l.b16 %v14
    %v47 = vunpack.c.l.b16 %v15
    %v48 = vunpack.c.l.b16 %v16
    %v49 = vunpack.c.l.b16 %v17
    %v50 = vunpack.c.l.b16 %v18
    %v51 = vunpack.c.l.b16 %v19
    %v52 = vunpack.c.l.b16 %v20
    %v53 = vunpack.c.l.b16 %v21
    %v54 = vunpack.c.l.b16 %v22
    %v55 = vunpack.c.l.b16 %v23
    %v56 = vunpack.c.l.b16 %v24
    %v57 = vunpack.c.l.b16 %v25
    %v58 = vunpack.c.l.b16 %v26
    %v59 = vunpack.c.l.b16 %v27
    %v60 = vunpack.c.l.b16 %v28
    %v61 = vunpack.c.l.b16 %v29
    %v62 = vpack.c.b16 %v47, %v46
    %v63 = vpack.c.b16 %v49, %v48
    %v64 = vpack.c.b16 %v51, %v50
    %v65 = vpack.c.b16 %v53, %v52
    %v66 = vpack.c.b16 %v55, %v54
    %v67 = vpack.c.b16 %v57, %v56
    %v68 = vpack.c.b16 %v59, %v58
    %v69 = vpack.c.b16 %v61, %v60
    %78 = vmatprep.subr.bf16.mxu0 0
    %79 = vmatpush1.bf16.msra.mxu0 %v69
    %80 = vmatprep.subr.bf16.mxu0 0
    %81 = vmatpush1.bf16.msra.mxu0 %v68
    %82 = vmatprep.subr.bf16.mxu0 0
    %83 = vmatpush1.bf16.msra.mxu0 %v67
    %84 = vmatprep.subr.bf16.mxu0 0
    %85 = vmatpush1.bf16.msra.mxu0 %v66
    %86 = vmatprep.subr.bf16.mxu0 0
    %87 = vmatpush1.bf16.msra.mxu0 %v65
    %88 = vmatprep.subr.bf16.mxu0 0
    %89 = vmatpush1.bf16.msra.mxu0 %v64
    %90 = vmatprep.subr.bf16.mxu0 0
    %91 = vmatpush1.bf16.msra.mxu0 %v63
    %92 = vmatprep.subr.bf16.mxu0 0
    %93 = vmatpush1.bf16.msra.mxu0 %v62
    %94 = vmatprep.subr.bf16.mxu0 0
    %95 = vmatpush2.bf16.msra.mxu0 0
    %96 = vmatprep.subr.bf16.mxu0 0
    %97 = vmatpush2.bf16.msra.mxu0 0
    %98 = vmatprep.subr.bf16.mxu0 0
    %99 = vmatpush2.bf16.msra.mxu0 0
    %100 = vmatprep.subr.bf16.mxu0 0
    %101 = vmatpush2.bf16.msra.mxu0 0
    %102 = vmatprep.subr.bf16.mxu0 0
    %103 = vmatpush2.bf16.msra.mxu0 0
    %104 = vmatprep.subr.bf16.mxu0 0
    %105 = vmatpush2.bf16.msra.mxu0 0
    %106 = vmatprep.subr.bf16.mxu0 0
    %107 = vmatpush2.bf16.msra.mxu0 0
    %108 = vmatprep.subr.bf16.mxu0 0
    %109 = vmatpush2.bf16.msra.mxu0 0
    %110 = vmatprep.mubr.bf16.mxu0 0
    %111 = vmatmul.mubr.bf16.gmra.mxu0 %v13
    %v112 = vpop.f32.mrf.mxu0
    %v113 = vadd.f32 0.0, %v112
    %v114 = vpop.f32.mrf.mxu0
    %v115 = vpop.f32.mrf.mxu0
    %v116 = vpop.f32.mrf.mxu0
    %117 = vdwg.mxu0
    %vm118 = vcmask 261120
    %v119 = vsel %vm118, %v113, 0.0
    %120 = vadd.xlane.f32.xlu0 %v119
    %v121 = vpop.xlane.xlu0 %120
    %v122 = vrcp.pop 32.0
    %v123 = vmul.f32 %v121, %v122
    %v124 = vsub.f32 %v113, %v123
    %v125 = vmul.f32 %v124, %v124
    %v126 = vsel %vm118, %v125, 0.0
    %127 = vadd.xlane.f32.xlu0 %v126
    %v128 = vpop.xlane.xlu0 %127
    %v129 = vmul.f32 %v128, %v122
    %v130 = vadd.f32 %v129, 1e-05
    %v131 = vrsqrt.pop %v130
    %v132 = vmul.f32 %v124, %v131
    %134 = vrot.lane.b32.xlu0 %v113, 96
    %v135 = vpop.permute.xlu0 %134
    %v137 = vsel %vm118, %v135, 0.0
    %138 = vadd.xlane.f32.xlu0 %v137
    %v139 = vpop.xlane.xlu0 %138
    %v140 = vmul.f32 %v139, %v122
    %v141 = vsub.f32 %v113, %v140
    %v142 = vmul.f32 %v141, %v141
    %144 = vrot.lane.b32.xlu0 %v142, 96
    %v145 = vpop.permute.xlu0 %144
    %v147 = vsel %vm118, %v145, 0.0
    %148 = vadd.xlane.f32.xlu0 %v147
    %v149 = vpop.xlane.xlu0 %148
    %v150 = vmul.f32 %v149, %v122
    %v151 = vadd.f32 %v150, 1e-05
    %v152 = vrsqrt.pop %v151
    %v153 = vmul.f32 %v141, %v152
    %154 = vrot.lane.b32.xlu0 %v113, 64
    %v155 = vpop.permute.xlu0 %154
    %v157 = vsel %vm118, %v155, 0.0
    %158 = vadd.xlane.f32.xlu0 %v157
    %v159 = vpop.xlane.xlu0 %158
    %v160 = vmul.f32 %v159, %v122
    %v161 = vsub.f32 %v113, %v160
    %v162 = vmul.f32 %v161, %v161
    %164 = vrot.lane.b32.xlu0 %v162, 64
    %v165 = vpop.permute.xlu0 %164
    %v167 = vsel %vm118, %v165, 0.0
    %168 = vadd.xlane.f32.xlu0 %v167
    %v169 = vpop.xlane.xlu0 %168
    %v170 = vmul.f32 %v169, %v122
    %v171 = vadd.f32 %v170, 1e-05
    %v172 = vrsqrt.pop %v171
    %v173 = vmul.f32 %v161, %v172
    %v174 = vpack.c.bf16 %v132, %v132
    %v175 = vpack.c.bf16 %v153, %v153
    %177 = vrot.lane.b32.xlu0 %v175, 96
    %v178 = vpop.permute.xlu0 %177
    %v180 = vsel %vm118, %v174, 0
    %v183 = vsel %vm118, %v178, 0
    %185 = vmatprep.subr.bf16.mxu0 0
    %186 = vmatpush1.bf16.xpose.msra.mxu0 0
    %187 = vmatprep.subr.bf16.mxu0 0
    %188 = vmatpush1.bf16.xpose.msra.mxu0 0
    %189 = vmatprep.subr.bf16.mxu0 0
    %190 = vmatpush1.bf16.xpose.msra.mxu0 0
    %191 = vmatprep.subr.bf16.mxu0 0
    %192 = vmatpush1.bf16.xpose.msra.mxu0 0
    %193 = vmatprep.subr.bf16.mxu0 0
    %194 = vmatpush1.bf16.xpose.msra.mxu0 0
    %195 = vmatprep.subr.bf16.mxu0 0
    %196 = vmatpush1.bf16.xpose.msra.mxu0 0
    %197 = vmatprep.subr.bf16.mxu0 0
    %198 = vmatpush1.bf16.xpose.msra.mxu0 0
    %199 = vmatprep.subr.bf16.mxu0 0
    %200 = vmatpush1.bf16.xpose.msra.mxu0 %v183
    %201 = vmatprep.subr.bf16.mxu0 0
    %202 = vmatpush2.bf16.xpose.msra.mxu0 0
    %203 = vmatprep.subr.bf16.mxu0 0
    %204 = vmatpush2.bf16.xpose.msra.mxu0 0
    %205 = vmatprep.subr.bf16.mxu0 0
    %206 = vmatpush2.bf16.xpose.msra.mxu0 0
    %207 = vmatprep.subr.bf16.mxu0 0
    %208 = vmatpush2.bf16.xpose.msra.mxu0 0
    %209 = vmatprep.subr.bf16.mxu0 0
    %210 = vmatpush2.bf16.xpose.msra.mxu0 0
    %211 = vmatprep.subr.bf16.mxu0 0
    %212 = vmatpush2.bf16.xpose.msra.mxu0 0
    %213 = vmatprep.subr.bf16.mxu0 0
    %214 = vmatpush2.bf16.xpose.msra.mxu0 0
    %215 = vmatprep.subr.bf16.mxu0 0
    %216 = vmatpush2.bf16.xpose.msra.mxu0 0
    %217 = vmatprep.mubr.bf16.mxu0 0
    %218 = vmatmul.mubr.bf16.gmra.mxu0 %v180
    %v219 = vpop.f32.mrf.mxu0
    %v220 = vadd.f32 0.0, %v219
    %v221 = vpop.f32.mrf.mxu0
    %v222 = vpop.f32.mrf.mxu0
    %v223 = vpop.f32.mrf.mxu0
    %224 = vdwg.mxu0
    %v225 = vmul.f32 %v220, 0.17677669
    %vm226 = vcmask 64512
    %v227 = vsel %vm226, %v225, -inf
    %228 = vmax.xlane.f32.xlu0 %v227
    %v229 = vpop.xlane.xlu0 %228
    %v230 = vsub.f32 %v225, %v229
    %v231 = vmul.f32 %v230, 1.442695
    %v232 = vpow.pop %v231
    %v233 = vsel %vm226, %v232, 0.0
    %234 = vadd.xlane.f32.xlu0 %v233
    %v235 = vpop.xlane.xlu0 %234
    %v236 = vrcp.pop %v235
    %v237 = vmul.f32 %v232, %v236
    %v238 = vpack.c.bf16 %v237, %v237
    %v239 = vpack.c.bf16 %v173, %v173
    %241 = vrot.lane.b32.xlu0 %v239, 64
    %v242 = vpop.permute.xlu0 %241
    %v244 = vsel %vm226, %v238, 0
    %vm246 = vcmask 1043456
    %v248 = vsel %vm246, %v242, 0
    %250 = vmatprep.subr.bf16.mxu0 0
    %251 = vmatpush1.bf16.msra.mxu0 0
    %252 = vmatprep.subr.bf16.mxu0 0
    %253 = vmatpush1.bf16.msra.mxu0 0
    %254 = vmatprep.subr.bf16.mxu0 0
    %255 = vmatpush1.bf16.msra.mxu0 0
    %256 = vmatprep.subr.bf16.mxu0 0
    %257 = vmatpush1.bf16.msra.mxu0 0
    %258 = vmatprep.subr.bf16.mxu0 0
    %259 = vmatpush1.bf16.msra.mxu0 0
    %260 = vmatprep.subr.bf16.mxu0 0
    %261 = vmatpush1.bf16.msra.mxu0 0
    %262 = vmatprep.subr.bf16.mxu0 0
    %263 = vmatpush1.bf16.msra.mxu0 0
    %264 = vmatprep.subr.bf16.mxu0 0
    %265 = vmatpush1.bf16.msra.mxu0 %v248
    %266 = vmatprep.subr.bf16.mxu0 0
    %267 = vmatpush2.bf16.msra.mxu0 0
    %268 = vmatprep.subr.bf16.mxu0 0
    %269 = vmatpush2.bf16.msra.mxu0 0
    %270 = vmatprep.subr.bf16.mxu0 0
    %271 = vmatpush2.bf16.msra.mxu0 0
    %272 = vmatprep.subr.bf16.mxu0 0
    %273 = vmatpush2.bf16.msra.mxu0 0
    %274 = vmatprep.subr.bf16.mxu0 0
    %275 = vmatpush2.bf16.msra.mxu0 0
    %276 = vmatprep.subr.bf16.mxu0 0
    %277 = vmatpush2.bf16.msra.mxu0 0
    %278 = vmatprep.subr.bf16.mxu0 0
    %279 = vmatpush2.bf16.msra.mxu0 0
    %280 = vmatprep.subr.bf16.mxu0 0
    %281 = vmatpush2.bf16.msra.mxu0 0
    %282 = vmatprep.mubr.bf16.mxu0 0
    %283 = vmatmul.mubr.bf16.gmra.mxu0 %v244
    %v284 = vpop.f32.mrf.mxu0
    %v285 = vadd.f32 0.0, %v284
    %v286 = vpop.f32.mrf.mxu0
    %v287 = vpop.f32.mrf.mxu0
    %v288 = vpop.f32.mrf.mxu0
    %289 = vdwg.mxu0
    %290 = vst.msk [vmem:[#allocation2] sm:$0xff] %vm118, %v285
    // Predicated region
    $region10: #{head_forward.1} parent=1 // pred_check
      _
    $region11: #{head_forward.1} parent=1 // pred_check_branch
      %292 = sbr.rel (0) target = $region13
    $region12: #{head_forward.1} parent=1 // pred_region
      %s294 = ssub.s32 128, 128
      %295 = vsyncadd [#allocation3], %s294
      %s297 = sshll.u32 [#allocation2], 4
      %s298 = int_to_ptr.vmem [resolvable:$true] %s297
      %300 = dma.vmem_to_hbm [thread:$0]  %s298, 128, %s2, [#allocation3]
    $region13: #{head_forward.1} parent=1 // pred_fallthru
      _
    // Predicated region
    $region14: #{head_forward.1} parent=1 // pred_check
      _
    $region15: #{head_forward.1} parent=1 // pred_check_branch
      %302 = sbr.rel (0) target = $region17
    $region16: #{head_forward.1} parent=1 // pred_region
      %303 = dma.done [#allocation3], 128
    $region17: #{head_forward.1} parent=1 // pred_fallthru
      _
    %304 = vsyncpa [#allocation3], 1

</llo_original>
